<compile_context>
chip_gen: v7x
topology: tpu7x:2x2x1
jax: 0.10.0
libtpu: 0.0.40
codegen_flags: <defaults>
</compile_context>

<pallas_src>
import functools

import jax
import jax.numpy as jnp
from jax import lax
from jax.experimental import pallas as pl
from jax.experimental.pallas import tpu as pltpu


_NEG_INF = -1e30  # finite "minus infinity": exp(_NEG_INF - m) underflows to 0.


def _round_up(x, m):
    return (x + m - 1) // m * m


def _default_use_bf16_exp():
    # bf16 exponentials target the v6e / v7x EUP; v5e and older have no bf16
    # EUP/VPU, so keep the exp in f32 there.
    try:
        kind = jax.devices()[0].device_kind.lower()
    except Exception:
        return True
    return not any(tag in kind for tag in ("v2", "v3", "v4", "v5"))


def _lse_kernel(z_ref, u_ref, pos_ref, out_ref, m_scr, l_scr, *,
                tile, n_valid, keys_resident, has_pad, use_bf16_exp):
    ki = pl.program_id(1)
    n_k = pl.num_programs(1)

    # ---- seed the online logsumexp with the positive logit (column 0 of the
    #      (pos | negatives) logits row): m = pos, l = exp(pos - pos) = 1.
    @pl.when(ki == 0)
    def _init():
        m_scr[...] = pos_ref[0]
        l_scr[...] = jnp.ones((1, tile), jnp.float32)

    # ---- one fused MXU call per grid step.
    if keys_resident:
        start = pl.multiple_of(ki * tile, tile)
        u_blk = u_ref[pl.ds(start, tile), :]          # (tile, D) bf16, VMEM-resident keys
    else:
        u_blk = u_ref[...]                            # (tile, D) bf16, streamed from HBM

    # keys-by-queries orientation -> every row statistic is lane-dense (1, tile)
    s = lax.dot_general(u_blk, z_ref[...], (((1,), (1,)), ((), ())),
                        preferred_element_type=jnp.float32)   # (tile_k, tile_q) f32

    if has_pad:  # only traced when N is not tile aligned
        key_ok = (ki * tile + lax.broadcasted_iota(jnp.int32, (tile, 1), 0)) < n_valid
        s = jnp.where(key_ok, s, _NEG_INF)

    m_old = m_scr[...]
    m_new = jnp.maximum(m_old, jnp.max(s, axis=0, keepdims=True))
    x = s - m_new
    if use_bf16_exp:      # v6e / v7x: EUP exp in bf16, accumulate in f32
        p = jnp.exp(x.astype(jnp.bfloat16)).astype(jnp.float32)
    else:                 # v5e and older: no bf16 EUP
        p = jnp.exp(x)
    l_scr[...] = jnp.exp(m_old - m_new) * l_scr[...] + jnp.sum(p, axis=0, keepdims=True)
    m_scr[...] = m_new

    # ---- after the last key tile: per-row loss = logsumexp([pos, negs]) - pos.
    #      (padded query rows are sliced off in the wrapper)
    @pl.when(ki == n_k - 1)
    def _finalize():
        out_ref[0] = m_scr[...] + jnp.log(l_scr[...]) - pos_ref[0]


def cross_nt_xent(z_i, z_j, u_i, u_j, temperature, *, tile_size=None,
                  keys_resident=None, use_bf16_exp=None):
    """Pallas TPU implementation of Cross_NT_Xent.forward (single device)."""
    B, D = z_i.shape
    N = 2 * B
    inv_t = 1.0 / float(temperature)
    if use_bf16_exp is None:
        use_bf16_exp = _default_use_bf16_exp()

    # ---- one fused XLA pass: normalise in f32 (rsqrt form == F.normalize with
    #      eps=1e-12), compute f32 positive logits, fold 1/T into keys, cast to bf16.
    def _normalize(x):
        x = x.astype(jnp.float32)
        ssq = jnp.sum(x * x, axis=1, keepdims=True)
        return x * lax.rsqrt(jnp.maximum(ssq, 1e-24))

    zi_n, zj_n, ui_n, uj_n = map(_normalize, (z_i, z_j, u_i, u_j))
    pos_half = jnp.sum(zi_n * zj_n, axis=1) * inv_t                          # (B,) f32
    pos = jnp.concatenate([pos_half, pos_half])                              # (N,) f32
    z = jnp.concatenate([zi_n, zj_n], axis=0).astype(jnp.bfloat16)           # (N, D)
    u = (jnp.concatenate([ui_n, uj_n], axis=0) * inv_t).astype(jnp.bfloat16)  # (N, D)

    # ---- tiling (bf16 input blocks want sublane multiples of 16)
    tile = tile_size if tile_size is not None else min(_round_up(N, 16), 256)
    assert tile % 16 == 0, "tile_size must be a multiple of 16"
    Np = _round_up(N, tile)
    has_pad = Np != N
    if has_pad:  # padded key rows are masked in-kernel, padded query rows sliced off
        z = jnp.pad(z, ((0, Np - N), (0, 0)))
        u = jnp.pad(u, ((0, Np - N), (0, 0)))
        pos = jnp.pad(pos, (0, Np - N))
    n_q = Np // tile
    n_k = Np // tile
    pos = pos.reshape(n_q, 1, tile)

    # ---- keep the whole bf16 key set VMEM-resident when it fits a conservative
    #      per-core budget (binding constraint is v7x: 64 MiB per TensorCore and
    #      the row axis is core-parallel); otherwise stream key tiles from HBM.
    key_bytes = Np * D * 2
    if keys_resident is None:
        keys_resident = 2 * key_bytes <= 24 * 1024 * 1024
    if keys_resident:
        u_spec = pl.BlockSpec((Np, D), lambda qi, ki: (0, 0))   # loaded once, never re-DMAed
    else:
        # TODO(synk): on v5e a deeper key pipeline (pipeline_mode=pl.Buffered(3))
        # would further hide HBM latency on this streamed fallback path.
        u_spec = pl.BlockSpec((tile, D), lambda qi, ki: (ki, 0))

    kernel = functools.partial(
        _lse_kernel, tile=tile, n_valid=N, keys_resident=keys_resident,
        has_pad=has_pad, use_bf16_exp=use_bf16_exp)

    grid_spec = pltpu.PrefetchScalarGridSpec(
        num_scalar_prefetch=0,
        grid=(n_q, n_k),
        in_specs=[
            pl.BlockSpec((tile, D), lambda qi, ki: (qi, 0)),        # query rows (resident over ki)
            u_spec,                                                 # key rows
            pl.BlockSpec((1, 1, tile), lambda qi, ki: (qi, 0, 0)),  # positive logits (lane-dense)
        ],
        out_specs=pl.BlockSpec((1, 1, tile), lambda qi, ki: (qi, 0, 0)),
        scratch_shapes=[
            pltpu.VMEM((1, tile), jnp.float32),   # running max
            pltpu.VMEM((1, tile), jnp.float32),   # running sum of exp
        ],
    )

    # explicit scoped-VMEM budget: double-buffered query blocks + keys + score
    # temporaries, capped well below v7x's 64 MiB / core.
    est = (4 * tile * D * 2
           + (2 * key_bytes if keys_resident else 4 * tile * D * 2)
           + 8 * tile * tile * 4
           + (1 << 20))
    vmem_limit = None if est <= 12 * 1024 * 1024 else min(est, 48 * 1024 * 1024)

    cost = pl.CostEstimate(
        flops=2 * Np * Np * D + 10 * Np * D,
        transcendentals=Np * Np + 2 * Np,
        bytes_accessed=(Np * D * 2) * (2 if keys_resident else 1 + n_q) + 2 * Np * 4,
    )

    row_losses = pl.pallas_call(
        kernel,
        out_shape=jax.ShapeDtypeStruct((n_q, 1, tile), jnp.float32),
        grid_spec=grid_spec,
        compiler_params=pltpu.CompilerParams(
            dimension_semantics=("parallel", "arbitrary"),
            vmem_limit_bytes=vmem_limit),
        cost_estimate=cost,
    )(z, u, pos)

    # CrossEntropyLoss(reduction='sum') over (pos | negatives) logits, / N.
    return jnp.sum(row_losses.reshape(-1)[:N]) / N


def _reference(z_i, z_j, u_i, u_j, temperature):
    """Pure-JAX mirror of the PyTorch forward (for correctness checking)."""
    def norm(x):
        return x / jnp.maximum(jnp.linalg.norm(x, axis=1, keepdims=True), 1e-12)

    z_i, z_j, u_i, u_j = map(norm, (z_i, z_j, u_i, u_j))
    B = z_i.shape[0]
    N = 2 * B
    z = jnp.concatenate([z_i, z_j], axis=0)
    u = jnp.concatenate([u_i, u_j], axis=0)
    sim_c = z @ z.T
    pos = jnp.concatenate(
        [jnp.diagonal(sim_c, B), jnp.diagonal(sim_c, -B)]).reshape(N, 1)
    neg = z @ u.T
    logits = jnp.concatenate([pos, neg], axis=1) / temperature
    lse = jax.scipy.special.logsumexp(logits, axis=1)
    return jnp.sum(lse - logits[:, 0]) / N


if __name__ == "__main__":
    TOL = dict(rtol=5e-3, atol=5e-3)  # bf16 MXU operands (+ bf16 exp on v6e/v7x)

    # Primary config, consistent with Cross_NT_Xent(batch_size=8, temperature=0.5).
    key = jax.random.PRNGKey(0)
    B, D = 8, 128
    temperature = 0.5
    k1, k2, k3, k4 = jax.random.split(key, 4)
    z_i = jax.random.normal(k1, (B, D), dtype=jnp.float32)
    z_j = jax.random.normal(k2, (B, D), dtype=jnp.float32)
    u_i = jax.random.normal(k3, (B, D), dtype=jnp.float32)
    u_j = jax.random.normal(k4, (B, D), dtype=jnp.float32)

    out = jax.block_until_ready(cross_nt_xent(z_i, z_j, u_i, u_j, temperature))
    ref = _reference(z_i, z_j, u_i, u_j, temperature)
    assert jnp.allclose(out, ref, **TOL), (out, ref)

    # Second config: multi-tile grid, online LSE across several key tiles and
    # row/column padding (B=20 -> N=40, tile=16 -> Np=48).  Exercise both the
    # HBM-streamed key path and the VMEM-resident key path.
    B2, D2 = 20, 64
    k5, k6, k7, k8 = jax.random.split(jax.random.PRNGKey(1), 4)
    a = jax.random.normal(k5, (B2, D2), dtype=jnp.float32)
    b = jax.random.normal(k6, (B2, D2), dtype=jnp.float32)
    c = jax.random.normal(k7, (B2, D2), dtype=jnp.float32)
    d = jax.random.normal(k8, (B2, D2), dtype=jnp.float32)
    ref2 = _reference(a, b, c, d, 0.2)

    out2 = jax.block_until_ready(
        cross_nt_xent(a, b, c, d, 0.2, tile_size=16, keys_resident=False))
    assert jnp.allclose(out2, ref2, **TOL), (out2, ref2)

    out3 = jax.block_until_ready(
        cross_nt_xent(a, b, c, d, 0.2, tile_size=16, keys_resident=True))
    assert jnp.allclose(out3, ref2, **TOL), (out3, ref2)

    print("KERNEL_OK")
</pallas_src>

<mosaic_0001>
module attributes {stable_mosaic.version = 11 : i64} {
  func.func @_lse_kernel(%arg0: i32, %arg1: i32, %arg2: memref<16x128xbf16, #tpu.memory_space<vmem>>, %arg3: memref<16x128xbf16, #tpu.memory_space<vmem>>, %arg4: memref<1x1x16xf32, #tpu.memory_space<vmem>>, %arg5: memref<1x1x16xf32, #tpu.memory_space<vmem>>, %arg6: memref<1x16xf32, #tpu.memory_space<vmem>>, %arg7: memref<1x16xf32, #tpu.memory_space<vmem>>) attributes {dimension_semantics = [#tpu.dimension_semantics<parallel>, #tpu.dimension_semantics<arbitrary>], iteration_bounds = array<i64: 1, 1>, scalar_prefetch = 0 : i64, scratch_operands = 2 : i64, tpu.core_type = #tpu.core_type<tc>, window_params = [{transform_indices = @transform_0, window_bounds = array<i64: 16, 128>}, {pipeline_mode = #tpu.pipeline_mode<synchronous>, transform_indices = @transform_1, window_bounds = array<i64: 16, 128>}, {transform_indices = @transform_2, window_bounds = array<i64: 1, 1, 16>}, {transform_indices = @transform_3, window_bounds = array<i64: 1, 1, 16>}]} {
    %c0_i32 = arith.constant 0 : i32
    %0 = arith.cmpi eq, %arg1, %c0_i32 : i32
    %1 = arith.extui %0 : i1 to i32
    %c0_i32_0 = arith.constant 0 : i32
    %2 = arith.cmpi ne, %1, %c0_i32_0 : i32
    scf.if %2 {
      %c0_15 = arith.constant 0 : index
      %c0_16 = arith.constant 0 : index
      %c0_17 = arith.constant 0 : index
      %30 = vector.load %arg4[%c0_15, %c0_16, %c0_17] : memref<1x1x16xf32, #tpu.memory_space<vmem>>, vector<1x1x16xf32>
      %31 = vector.shape_cast %30 : vector<1x1x16xf32> to vector<1x16xf32>
      %c0_18 = arith.constant 0 : index
      %c0_19 = arith.constant 0 : index
      %32 = vector.load %arg6[%c0_18, %c0_19] : memref<1x16xf32, #tpu.memory_space<vmem>>, vector<1x16xf32>
      tpu.vector_store %arg6[%c0_18, %c0_19], %31 {strides = array<i32>} : memref<1x16xf32, #tpu.memory_space<vmem>>, vector<1x16xf32>,
      %cst_20 = arith.constant 1.000000e+00 : f32
      %33 = vector.broadcast %cst_20 : f32 to vector<1x16xf32>
      %c0_21 = arith.constant 0 : index
      %c0_22 = arith.constant 0 : index
      %34 = vector.load %arg7[%c0_21, %c0_22] : memref<1x16xf32, #tpu.memory_space<vmem>>, vector<1x16xf32>
      tpu.vector_store %arg7[%c0_21, %c0_22], %33 {strides = array<i32>} : memref<1x16xf32, #tpu.memory_space<vmem>>, vector<1x16xf32>,
    } else {
    }
    %c16_i32 = arith.constant 16 : i32
    %3 = arith.muli %arg1, %c16_i32 : i32
    %4 = tpu.assume_multiple %3, 16 : i32
    %5 = arith.index_cast %4 : i32 to index
    %c0 = arith.constant 0 : index
    %6 = vector.load %arg3[%5, %c0] : memref<16x128xbf16, #tpu.memory_space<vmem>>, vector<16x128xbf16>
    %c0_1 = arith.constant 0 : index
    %c0_2 = arith.constant 0 : index
    %7 = vector.load %arg2[%c0_1, %c0_2] : memref<16x128xbf16, #tpu.memory_space<vmem>>, vector<16x128xbf16>
    %cst = arith.constant dense<0.000000e+00> : vector<16x16xf32>
    %8 = tpu.matmul %6, %7, %cst {dimension_numbers = #tpu.dot_dimension_numbers<[1], [1], [0], [0], [0, 0, 1, 0], [], []>} : vector<16x128xbf16>, vector<16x128xbf16>, vector<16x16xf32> -> vector<16x16xf32>
    %c0_3 = arith.constant 0 : index
    %c0_4 = arith.constant 0 : index
    %9 = vector.load %arg6[%c0_3, %c0_4] : memref<1x16xf32, #tpu.memory_space<vmem>>, vector<1x16xf32>
    %cst_5 = arith.constant dense<0xFF800000> : vector<16xf32>
    %10 = vector.multi_reduction <maximumf>, %8, %cst_5 [0] : vector<16x16xf32> to vector<16xf32>
    %11 = vector.shape_cast %10 : vector<16xf32> to vector<1x16xf32>
    %12 = arith.maximumf %9, %11 : vector<1x16xf32>
    %13 = vector.broadcast %12 : vector<1x16xf32> to vector<16x16xf32>
    %14 = arith.subf %8, %13 : vector<16x16xf32>
    %15 = arith.truncf %14 : vector<16x16xf32> to vector<16x16xbf16>
    %16 = math.exp %15 : vector<16x16xbf16>
    %17 = arith.extf %16 : vector<16x16xbf16> to vector<16x16xf32>
    %18 = arith.subf %9, %12 : vector<1x16xf32>
    %19 = math.exp %18 : vector<1x16xf32>
    %c0_6 = arith.constant 0 : index
    %c0_7 = arith.constant 0 : index
    %20 = vector.load %arg7[%c0_6, %c0_7] : memref<1x16xf32, #tpu.memory_space<vmem>>, vector<1x16xf32>
    %21 = arith.mulf %19, %20 : vector<1x16xf32>
    %cst_8 = arith.constant dense<0.000000e+00> : vector<16xf32>
    %22 = vector.multi_reduction <add>, %17, %cst_8 [0] : vector<16x16xf32> to vector<16xf32>
    %23 = vector.shape_cast %22 : vector<16xf32> to vector<1x16xf32>
    %24 = arith.addf %21, %23 : vector<1x16xf32>
    %c0_9 = arith.constant 0 : index
    %c0_10 = arith.constant 0 : index
    %25 = vector.load %arg7[%c0_9, %c0_10] : memref<1x16xf32, #tpu.memory_space<vmem>>, vector<1x16xf32>
    tpu.vector_store %arg7[%c0_9, %c0_10], %24 {strides = array<i32>} : memref<1x16xf32, #tpu.memory_space<vmem>>, vector<1x16xf32>,
    %c0_11 = arith.constant 0 : index
    %c0_12 = arith.constant 0 : index
    %26 = vector.load %arg6[%c0_11, %c0_12] : memref<1x16xf32, #tpu.memory_space<vmem>>, vector<1x16xf32>
    tpu.vector_store %arg6[%c0_11, %c0_12], %12 {strides = array<i32>} : memref<1x16xf32, #tpu.memory_space<vmem>>, vector<1x16xf32>,
    %c0_i32_13 = arith.constant 0 : i32
    %27 = arith.cmpi eq, %arg1, %c0_i32_13 : i32
    %28 = arith.extui %27 : i1 to i32
    %c0_i32_14 = arith.constant 0 : i32
    %29 = arith.cmpi ne, %28, %c0_i32_14 : i32
    scf.if %29 {
      %c0_15 = arith.constant 0 : index
      %c0_16 = arith.constant 0 : index
      %30 = vector.load %arg6[%c0_15, %c0_16] : memref<1x16xf32, #tpu.memory_space<vmem>>, vector<1x16xf32>
      %c0_17 = arith.constant 0 : index
      %c0_18 = arith.constant 0 : index
      %31 = vector.load %arg7[%c0_17, %c0_18] : memref<1x16xf32, #tpu.memory_space<vmem>>, vector<1x16xf32>
      %32 = math.log %31 : vector<1x16xf32>
      %33 = arith.addf %30, %32 : vector<1x16xf32>
      %c0_19 = arith.constant 0 : index
      %c0_20 = arith.constant 0 : index
      %c0_21 = arith.constant 0 : index
      %34 = vector.load %arg4[%c0_19, %c0_20, %c0_21] : memref<1x1x16xf32, #tpu.memory_space<vmem>>, vector<1x1x16xf32>
      %35 = vector.shape_cast %34 : vector<1x1x16xf32> to vector<1x16xf32>
      %36 = arith.subf %33, %35 : vector<1x16xf32>
      %c0_22 = arith.constant 0 : index
      %c0_23 = arith.constant 0 : index
      %c0_24 = arith.constant 0 : index
      %37 = vector.load %arg5[%c0_22, %c0_23, %c0_24] : memref<1x1x16xf32, #tpu.memory_space<vmem>>, vector<1x1x16xf32>
      %38 = vector.shape_cast %37 : vector<1x1x16xf32> to vector<1x16xf32>
      %39 = vector.shape_cast %36 : vector<1x16xf32> to vector<1x1x16xf32>
      tpu.vector_store %arg5[%c0_22, %c0_23, %c0_24], %39 {strides = array<i32>} : memref<1x1x16xf32, #tpu.memory_space<vmem>>, vector<1x1x16xf32>,
    } else {
    }
    return
  }
  func.func @transform_0(%arg0: i32, %arg1: i32) -> (i32, i32) {
    %c0_i32 = arith.constant 0 : i32
    %c0_i32_0 = arith.constant 0 : i32
    return %arg0, %c0_i32 : i32, i32
  }
  func.func @transform_1(%arg0: i32, %arg1: i32) -> (i32, i32) {
    %c0_i32 = arith.constant 0 : i32
    %c0_i32_0 = arith.constant 0 : i32
    %c0_i32_1 = arith.constant 0 : i32
    return %c0_i32, %c0_i32_0 : i32, i32
  }
  func.func @transform_2(%arg0: i32, %arg1: i32) -> (i32, i32, i32) {
    %c0_i32 = arith.constant 0 : i32
    %c0_i32_0 = arith.constant 0 : i32
    %c0_i32_1 = arith.constant 0 : i32
    return %arg0, %c0_i32, %c0_i32_0 : i32, i32, i32
  }
  func.func @transform_3(%arg0: i32, %arg1: i32) -> (i32, i32, i32) {
    %c0_i32 = arith.constant 0 : i32
    %c0_i32_0 = arith.constant 0 : i32
    %c0_i32_1 = arith.constant 0 : i32
    return %arg0, %c0_i32, %c0_i32_0 : i32, i32, i32
  }
}

</mosaic_0001>

<llo_original>
// kernel: tpu_custom_call.1
$region0: #{tpu_custom_call.1}
  #allocation0 [shape = 'u32[]', space=smem, size = 0x4, offset = 0x4, fixed_abs, tag = 'smem constant byte address 0x4 - core index']
  #allocation1 [shape = 'u32[144,128]{1,0:T(1,128)}', space=vmem, size = 0x12000, scoped, tag = 'internal scratch']
  #allocation2 [shape = 'f32[1,16]{1,0:T(1,128)}', space=vmem, size = 0x200, scoped, tag = 'scratch operand']
  #allocation3 [shape = 'f32[1,16]{1,0:T(1,128)}', space=vmem, size = 0x200, scoped, tag = 'scratch operand']
  %s0 = inlined_call_operand.hbm [shape: bf16[16,128], index: 0, kind: input, shape index: {}]
  %s1 = inlined_call_operand.hbm [shape: bf16[16,128], index: 1, kind: input, shape index: {}]
  %s2 = inlined_call_operand.vmem [shape: f32[1,1,16], index: 2, kind: input, shape index: {}]
  %s3 = inlined_call_operand.hbm [shape: f32[1,1,16], index: 3, kind: output, shape index: {}]
  %s4 = sld [smem:[#allocation0]]
  $region38: #{tpu_custom_call.1} parent=0
    _
  %s6 = ssub.s32 1, %s4
  %s7 = scalar_select 0, %s6, %s4
  $region1: #{tpu_custom_call.1} parent=0
    #allocation4 [shape = 'u8[4096]{0}', space=vmem, size = 0x1000, scoped, tag = 'input window, operand 0, single buffered']
    #allocation5 [shape = 's32[1]{0}', space=sflag, size = 0x4, scoped, tag = 'scoped memory for tpu_custom_call.1']
    #allocation6 [shape = 's32[1]{0}', space=sflag, size = 0x4, scoped, tag = 'scoped memory for tpu_custom_call.1']
    #allocation7 [shape = 'u8[4096]{0}', space=vmem, size = 0x1000, scoped, tag = 'input window, operand 1, single buffered']
    #allocation8 [shape = 's32[1]{0}', space=sflag, size = 0x4, scoped, tag = 'scoped memory for tpu_custom_call.1']
    #allocation9 [shape = 'u8[512]{0}', space=vmem, size = 0x400, scoped, tag = 'output window, operand 0, single buffered']
    %8 = vsyncpa [#allocation5], 0
    %9 = vsyncpa [#allocation8], 0
    %10 = vsyncpa [#allocation6], 0
    // Predicated region
    $region2: #{tpu_custom_call.1} parent=1 // pred_check
      _
    $region3: #{tpu_custom_call.1} parent=1 // pred_check_branch
      %12 = sbr.rel (0) target = $region5
    $region4: #{tpu_custom_call.1} parent=1 // pred_region
      %s14 = ssub.s32 128, 128
      %15 = vsyncadd [#allocation5], %s14
      %s16 = sshll.u32 [#allocation4], 4
      %s17 = int_to_ptr.vmem [resolvable:$true] %s16
      %22 = dma.hbm_to_vmem [thread:$0]  %s0, 128, %s17, [#allocation5], 64, 64, 4
    $region5: #{tpu_custom_call.1} parent=1 // pred_fallthru
      _
    // Predicated region
    $region6: #{tpu_custom_call.1} parent=1 // pred_check
      _
    $region7: #{tpu_custom_call.1} parent=1 // pred_check_branch
      %24 = sbr.rel (0) target = $region9
    $region8: #{tpu_custom_call.1} parent=1 // pred_region
      %s26 = ssub.s32 128, 128
      %27 = vsyncadd [#allocation8], %s26
      %s28 = sshll.u32 [#allocation7], 4
      %s29 = int_to_ptr.vmem [resolvable:$true] %s28
      %34 = dma.hbm_to_vmem [thread:$0]  %s1, 128, %s29, [#allocation8], 64, 64, 4
    $region9: #{tpu_custom_call.1} parent=1 // pred_fallthru
      _
    // Predicated region
    $region10: #{tpu_custom_call.1} parent=1 // pred_check
      _
    $region11: #{tpu_custom_call.1} parent=1 // pred_check_branch
      %36 = sbr.rel (0) target = $region13
    $region12: #{tpu_custom_call.1} parent=1 // pred_region
      _
    $region13: #{tpu_custom_call.1} parent=1 // pred_fallthru
      _
    // Predicated region
    $region14: #{tpu_custom_call.1} parent=1 // pred_check
      _
    $region15: #{tpu_custom_call.1} parent=1 // pred_check_branch
      %38 = sbr.rel (0) target = $region17
    $region16: #{tpu_custom_call.1} parent=1 // pred_region
      %39 = dma.done [#allocation5], 128
    $region17: #{tpu_custom_call.1} parent=1 // pred_fallthru
      _
    // Predicated region
    $region18: #{tpu_custom_call.1} parent=1 // pred_check
      _
    $region19: #{tpu_custom_call.1} parent=1 // pred_check_branch
      %41 = sbr.rel (0) target = $region21
    $region20: #{tpu_custom_call.1} parent=1 // pred_region
      %42 = dma.done [#allocation8], 128
    $region21: #{tpu_custom_call.1} parent=1 // pred_fallthru
      _
    %p44 = scmp.eq.s32.totalorder 0, 0
    // Predicated region
    $region22: #{tpu_custom_call.1} parent=1 // pred_check
      %p45 = pneg %p44
    $region23: #{tpu_custom_call.1} parent=1 // pred_check_branch
      %47 = sbr.rel (%p45) target = $region25
    $region24: #{tpu_custom_call.1} parent=1 // pred_region
      %v48 = vld [vmem:[%s2] sm:$0x1]
      %vm49 = vcmask 122880
      %50 = vst.msk [vmem:[#allocation2] sm:$0x1] %vm49, %v48
      %51 = vst.msk [vmem:[#allocation3] sm:$0x1] %vm49, 1.0
    $region25: #{tpu_custom_call.1} parent=1 // pred_fallthru
      _
    %s52 = smul.u32 0, 16
    %s53 = sshra.s32 %s52, 3
    %s54 = sand.u32 %s52, 7
    %s55 = smul.addr %s53, 4
    %s56 = scalar_lea.vmem [#allocation7], %s55
    %v57 = vld [vmem:[%s56] sm:$0xf]
    %v58 = vld [vmem:[%s56 + $0x4] sm:$0xf]
    %v59 = vld [vmem:[#allocation4] sm:$0xf]
    %v60 = vld [vmem:[#allocation4 + $0x4] sm:$0xf]
    %v63 = vunpack.c.l.b16 %v57
    %v64 = vunpack.c.l.b16 %v58
    %v65 = vpack.c.b16 %v64, %v63
    %v69 = vunpack.c.l.b16 %v59
    %v70 = vunpack.c.l.b16 %v60
    %v71 = vpack.c.b16 %v70, %v69
    %73 = vmatprep.subr.bf16.mxu0 0
    %74 = vmatpush1.bf16.xpose.msra.mxu0 %v71
    %75 = vmatprep.subr.bf16.mxu0 0
    %76 = vmatpush1.bf16.xpose.msra.mxu0 0
    %77 = vmatprep.subr.bf16.mxu0 0
    %78 = vmatpush1.bf16.xpose.msra.mxu0 0
    %79 = vmatprep.subr.bf16.mxu0 0
    %80 = vmatpush1.bf16.xpose.msra.mxu0 0
    %81 = vmatprep.subr.bf16.mxu0 0
    %82 = vmatpush1.bf16.xpose.msra.mxu0 0
    %83 = vmatprep.subr.bf16.mxu0 0
    %84 = vmatpush1.bf16.xpose.msra.mxu0 0
    %85 = vmatprep.subr.bf16.mxu0 0
    %86 = vmatpush1.bf16.xpose.msra.mxu0 0
    %87 = vmatprep.subr.bf16.mxu0 0
    %88 = vmatpush1.bf16.xpose.msra.mxu0 0
    %89 = vmatprep.subr.bf16.mxu0 0
    %90 = vmatpush1.bf16.xpose.msra.mxu0 0
    %91 = vmatprep.subr.bf16.mxu0 0
    %92 = vmatpush1.bf16.xpose.msra.mxu0 0
    %93 = vmatprep.subr.bf16.mxu0 0
    %94 = vmatpush1.bf16.xpose.msra.mxu0 0
    %95 = vmatprep.subr.bf16.mxu0 0
    %96 = vmatpush1.bf16.xpose.msra.mxu0 0
    %97 = vmatprep.subr.bf16.mxu0 0
    %98 = vmatpush1.bf16.xpose.msra.mxu0 0
    %99 = vmatprep.subr.bf16.mxu0 0
    %100 = vmatpush1.bf16.xpose.msra.mxu0 0
    %101 = vmatprep.subr.bf16.mxu0 0
    %102 = vmatpush1.bf16.xpose.msra.mxu0 0
    %103 = vmatprep.subr.bf16.mxu0 0
    %104 = vmatpush1.bf16.xpose.msra.mxu0 0
    %105 = vmatprep.mubr.bf16.mxu0 0
    %106 = vmatmul.mubr.bf16.gmra.mrb[0].mxu0 %v65
    %v107 = vpop.f32.mrb[0].mxu0
    %v108 = vadd.f32 0.0, %v107
    %v109 = vpop.f32.mrb[0].mxu0
    %v110 = vpop.f32.mrb[0].mxu0
    %v111 = vadd.f32 0.0, %v110
    %v112 = vpop.f32.mrb[0].mxu0
    %113 = vdwg.mxu0
    %v114 = vld [vmem:[#allocation2] sm:$0x1]
    %vm115 = vcmask 130048
    %v116 = vsel %vm115, %v108, -inf
    %v117 = vsel %vm115, %v111, -inf
    %v118 = vmax.f32 %v116, %v117
    %v119 = vrot.slane %v118, 4
    %v120 = vmax.f32 %v118, %v119
    %v121 = vrot.slane %v120, 2
    %v122 = vmax.f32 %v120, %v121
    %v123 = vrot.slane %v122, 1
    %v124 = vmax.f32 %v122, %v123
    %v125 = vmax.f32 %v114, %v124
    %v127 = vlaneseq
    %v128 = vshrl.u32 %v127, 7
    %v129 = vsub.s32 0, %v128
    %v130 = vrot.slane %v125, %v129
    %v132 = vsub.f32 %v108, %v130
    %v133 = vsub.f32 %v111, %v130
    %v134 = vpack.c.bf16 %v133, %v132
    %v136 = vmul.bf16 %v134, 1069105081
    %v137 = vpow.bf16.pop %v136
    %v138 = vunpack.c.l.bf16 %v137
    %v139 = vunpack.c.h.bf16 %v137
    %v140 = vsub.f32 %v114, %v125
    %v141 = vmul.f32 %v140, 1.442695
    %v142 = vpow.pop %v141
    %v143 = vld [vmem:[#allocation3] sm:$0x1]
    %v144 = vmul.f32 %v142, %v143
    %v145 = vsel %vm115, %v138, 0.0
    %v146 = vsel %vm115, %v139, 0.0
    %v147 = vadd.f32 %v145, %v146
    %v148 = vrot.slane %v147, 4
    %v149 = vadd.f32 %v147, %v148
    %v150 = vrot.slane %v149, 2
    %v151 = vadd.f32 %v149, %v150
    %v152 = vrot.slane %v151, 1
    %v153 = vadd.f32 %v151, %v152
    %v154 = vadd.f32 %v144, %v153
    %vm155 = vcmask 122880
    %156 = vst.msk [vmem:[#allocation3] sm:$0x1] %vm155, %v154
    %157 = vst.msk [vmem:[#allocation2] sm:$0x1] %vm155, %v125
    // Predicated region
    $region26: #{tpu_custom_call.1} parent=1 // pred_check
      %p158 = pneg %p44
    $region27: #{tpu_custom_call.1} parent=1 // pred_check_branch
      %160 = sbr.rel (%p158) target = $region29
    $region28: #{tpu_custom_call.1} parent=1 // pred_region
      %v161 = vld [vmem:[#allocation2] sm:$0x1]
      %v162 = vld [vmem:[#allocation3] sm:$0x1]
      %v163 = vlog2.pop %v162
      %v164 = vmul.f32 %v163, 0.6931472
      %v165 = vadd.f32 %v161, %v164
      %v166 = vld [vmem:[%s2] sm:$0x1]
      %v167 = vsub.f32 %v165, %v166
      %168 = vst.msk [vmem:[#allocation9] sm:$0x1] %vm155, %v167
    $region29: #{tpu_custom_call.1} parent=1 // pred_fallthru
      _
    // Predicated region
    $region30: #{tpu_custom_call.1} parent=1 // pred_check
      _
    $region31: #{tpu_custom_call.1} parent=1 // pred_check_branch
      %170 = sbr.rel (0) target = $region33
    $region32: #{tpu_custom_call.1} parent=1 // pred_region
      %s172 = ssub.s32 16, 16
      %173 = vsyncadd [#allocation6], %s172
      %s175 = sshll.u32 [#allocation9], 4
      %s176 = int_to_ptr.vmem [resolvable:$true] %s175
      %178 = dma.vmem_to_hbm [thread:$0]  %s176, 16, %s3, [#allocation6]
    $region33: #{tpu_custom_call.1} parent=1 // pred_fallthru
      _
    // Predicated region
    $region34: #{tpu_custom_call.1} parent=1 // pred_check
      _
    $region35: #{tpu_custom_call.1} parent=1 // pred_check_branch
      %180 = sbr.rel (0) target = $region37
    $region36: #{tpu_custom_call.1} parent=1 // pred_region
      %181 = dma.done [#allocation6], 16
    $region37: #{tpu_custom_call.1} parent=1 // pred_fallthru
      _
    %182 = vsyncpa [#allocation5], 1
    %183 = vsyncpa [#allocation8], 1
    %184 = vsyncpa [#allocation6], 1

</llo_original>
